<compile_context>
chip_gen: v5e
topology: v5e:2x2
jax: 0.10.0
libtpu: 0.0.40
codegen_flags: <defaults>
</compile_context>

<pallas_src>
import jax
import jax.numpy as jnp
from jax.experimental import pallas as pl
from jax.experimental.pallas import tpu as pltpu

_LANE = 128
_SUBLANE = 8


def _round_up(x, m):
    return ((x + m - 1) // m) * m


def _make_decoder_kernel(num_layers):
    """Fused MLP kernel: (Linear -> ReLU) repeated `num_layers` times.

    Ref order: (x_ref, w0, b0, w1, b1, ..., w_{L-1}, b_{L-1}, out_ref).
    Matmuls take bf16 operands and accumulate in f32 on the MXU; the bias add
    and ReLU run in f32 on the VPU.
    """

    def kernel(x_ref, *refs):
        out_ref = refs[-1]
        param_refs = refs[:-1]
        assert len(param_refs) == 2 * num_layers
        h_bf16 = x_ref[...]                              # (tile, in_pad) bf16
        h_f32 = None
        for i in range(num_layers):
            w = param_refs[2 * i][...]                   # (in_pad, out_pad) bf16
            b = param_refs[2 * i + 1][...]               # (1, out_pad) f32
            acc = jnp.dot(h_bf16, w, preferred_element_type=jnp.float32)
            h_f32 = jnp.maximum(acc + b, 0.0)            # Linear -> ReLU (every layer)
            if i < num_layers - 1:
                h_bf16 = h_f32.astype(jnp.bfloat16)      # bf16 feed for next MXU pass
        out_ref[...] = h_f32                             # lane-dense f32 store

    return kernel


def vae_decoder_forward(z, weights, biases, *, batch_tile=256):
    """VAEDecoder forward as a single fused pallas_call.

    Args:
      z:        (B, latent_dim) float32.
      weights:  list of (in_f, out_f) float32 arrays (transpose of torch
                nn.Linear.weight), ordered latent->hidden[-1]->...->input_dim.
      biases:   list of (out_f,) float32 arrays.
      batch_tile: max rows of z processed per grid step.

    Returns: (B, input_dim) float32.
    """
    B, latent_dim = z.shape
    num_layers = len(weights)
    out_dim = weights[-1].shape[1]

    # ---- batch tiling: big tiles, padded to a multiple of the tile ---------
    tile = _round_up(min(batch_tile, _round_up(B, _SUBLANE)), _SUBLANE)
    B_pad = _round_up(B, tile)
    grid = (B_pad // tile,)

    # ---- pad every feature dim to a lane multiple (>=128) ------------------
    # Padded input columns hit zero weight rows; padded output columns get
    # zero weight columns + zero bias, and ReLU(0) = 0, so padding is exact.
    feat_dims = [latent_dim] + [w.shape[1] for w in weights]
    pad_dims = [_round_up(max(d, _LANE), _LANE) for d in feat_dims]

    z_p = jnp.zeros((B_pad, pad_dims[0]), jnp.bfloat16)
    z_p = z_p.at[:B, :latent_dim].set(z.astype(jnp.bfloat16))

    w_p, b_p = [], []
    for i, (w, b) in enumerate(zip(weights, biases)):
        in_f, out_f = w.shape
        wp = jnp.zeros((pad_dims[i], pad_dims[i + 1]), jnp.bfloat16)
        wp = wp.at[:in_f, :out_f].set(w.astype(jnp.bfloat16))
        bp = jnp.zeros((1, pad_dims[i + 1]), jnp.float32)
        bp = bp.at[0, :out_f].set(b.astype(jnp.float32))
        w_p.append(wp)
        b_p.append(bp)

    # z is tiled over batch; parameters use the same (full) block every grid
    # step, so they stay resident in VMEM (tiny at these widths).
    # TODO(synk): for very wide hidden layers, tile out_features / add a K
    # reduction axis instead of keeping full weights resident (v7x 64 MiB VMEM).
    in_specs = [pl.BlockSpec((tile, pad_dims[0]), lambda i: (i, 0))]
    for wp, bp in zip(w_p, b_p):
        in_specs.append(pl.BlockSpec(wp.shape, lambda i: (0, 0)))
        in_specs.append(pl.BlockSpec(bp.shape, lambda i: (0, 0)))
    out_spec = pl.BlockSpec((tile, pad_dims[-1]), lambda i: (i, 0))

    fn = pl.pallas_call(
        _make_decoder_kernel(num_layers),
        out_shape=jax.ShapeDtypeStruct((B_pad, pad_dims[-1]), jnp.float32),
        grid_spec=pltpu.PrefetchScalarGridSpec(
            num_scalar_prefetch=0,
            grid=grid,
            in_specs=in_specs,
            out_specs=out_spec,
        ),
        compiler_params=pltpu.CompilerParams(
            dimension_semantics=("parallel",),
        ),
    )

    args = [z_p]
    for wp, bp in zip(w_p, b_p):
        args.append(wp)
        args.append(bp)
    out = fn(*args)
    return out[:B, :out_dim]


def _reference_forward(z, weights, biases):
    # Mirrors the kernel numerics: bf16 matmul operands, f32 accumulation,
    # ReLU after every layer (including the last, as in the PyTorch module).
    h = z.astype(jnp.bfloat16)
    h_f32 = None
    for w, b in zip(weights, biases):
        acc = jnp.dot(h, w.astype(jnp.bfloat16),
                      preferred_element_type=jnp.float32)
        h_f32 = jnp.maximum(acc + b.astype(jnp.float32), 0.0)
        h = h_f32.astype(jnp.bfloat16)
    return h_f32


if __name__ == "__main__":
    # VAEDecoder config (mirrors args.input_dim / args.hidden / args.latent_dim)
    input_dim = 16
    hidden = [32, 32]
    latent_dim = 8
    batch = 256            # with batch_tile=128 -> 2 parallel grid steps (both v7x TCs)

    key = jax.random.PRNGKey(0)

    # Layer widths: latent -> hidden[-1] -> ... -> hidden[0] -> input_dim.
    dims = [latent_dim] + list(reversed(hidden)) + [input_dim]
    weights, biases = [], []
    for in_f, out_f in zip(dims[:-1], dims[1:]):
        key, kw, kb = jax.random.split(key, 3)
        scale = 1.0 / jnp.sqrt(jnp.float32(in_f))
        weights.append(jax.random.uniform(kw, (in_f, out_f), jnp.float32,
                                          minval=-scale, maxval=scale))
        biases.append(jax.random.uniform(kb, (out_f,), jnp.float32,
                                         minval=-scale, maxval=scale))

    key, kz = jax.random.split(key)
    z = jax.random.normal(kz, (batch, latent_dim), jnp.float32)

    out = vae_decoder_forward(z, weights, biases, batch_tile=128)
    out = jax.block_until_ready(out)

    ref = _reference_forward(z, weights, biases)
    assert out.shape == (batch, input_dim)
    assert jnp.allclose(out, ref, atol=1e-3, rtol=1e-3), \
        float(jnp.max(jnp.abs(out - ref)))

    print("KERNEL_OK")
</pallas_src>

<mosaic_0001>
module attributes {stable_mosaic.version = 11 : i64} {
  func.func @kernel(%arg0: i32, %arg1: memref<128x128xbf16, #tpu.memory_space<vmem>>, %arg2: memref<128x128xbf16, #tpu.memory_space<vmem>>, %arg3: memref<1x128xf32, #tpu.memory_space<vmem>>, %arg4: memref<128x128xbf16, #tpu.memory_space<vmem>>, %arg5: memref<1x128xf32, #tpu.memory_space<vmem>>, %arg6: memref<128x128xbf16, #tpu.memory_space<vmem>>, %arg7: memref<1x128xf32, #tpu.memory_space<vmem>>, %arg8: memref<128x128xf32, #tpu.memory_space<vmem>>) attributes {dimension_semantics = [#tpu.dimension_semantics<parallel>], iteration_bounds = array<i64: 2>, scalar_prefetch = 0 : i64, scratch_operands = 0 : i64, tpu.core_type = #tpu.core_type<tc>, window_params = [{transform_indices = @transform_0, window_bounds = array<i64: 128, 128>}, {pipeline_mode = #tpu.pipeline_mode<synchronous>, transform_indices = @transform_1, window_bounds = array<i64: 128, 128>}, {pipeline_mode = #tpu.pipeline_mode<synchronous>, transform_indices = @transform_2, window_bounds = array<i64: 1, 128>}, {pipeline_mode = #tpu.pipeline_mode<synchronous>, transform_indices = @transform_3, window_bounds = array<i64: 128, 128>}, {pipeline_mode = #tpu.pipeline_mode<synchronous>, transform_indices = @transform_4, window_bounds = array<i64: 1, 128>}, {pipeline_mode = #tpu.pipeline_mode<synchronous>, transform_indices = @transform_5, window_bounds = array<i64: 128, 128>}, {pipeline_mode = #tpu.pipeline_mode<synchronous>, transform_indices = @transform_6, window_bounds = array<i64: 1, 128>}, {transform_indices = @transform_7, window_bounds = array<i64: 128, 128>}]} {
    %c0 = arith.constant 0 : index
    %c0_0 = arith.constant 0 : index
    %0 = vector.load %arg1[%c0, %c0_0] : memref<128x128xbf16, #tpu.memory_space<vmem>>, vector<128x128xbf16>
    %c0_1 = arith.constant 0 : index
    %c0_2 = arith.constant 0 : index
    %1 = vector.load %arg2[%c0_1, %c0_2] : memref<128x128xbf16, #tpu.memory_space<vmem>>, vector<128x128xbf16>
    %c0_3 = arith.constant 0 : index
    %c0_4 = arith.constant 0 : index
    %2 = vector.load %arg3[%c0_3, %c0_4] : memref<1x128xf32, #tpu.memory_space<vmem>>, vector<1x128xf32>
    %cst = arith.constant dense<0.000000e+00> : vector<128x128xf32>
    %3 = tpu.matmul %0, %1, %cst {dimension_numbers = #tpu.dot_dimension_numbers<[1], [0], [0], [1], [0, 0, 1, 1], [], []>} : vector<128x128xbf16>, vector<128x128xbf16>, vector<128x128xf32> -> vector<128x128xf32>
    %4 = vector.broadcast %2 : vector<1x128xf32> to vector<128x128xf32>
    %5 = arith.addf %3, %4 : vector<128x128xf32>
    %cst_5 = arith.constant 0.000000e+00 : f32
    %6 = vector.broadcast %cst_5 : f32 to vector<128x128xf32>
    %7 = arith.maximumf %5, %6 : vector<128x128xf32>
    %8 = arith.truncf %7 : vector<128x128xf32> to vector<128x128xbf16>
    %c0_6 = arith.constant 0 : index
    %c0_7 = arith.constant 0 : index
    %9 = vector.load %arg4[%c0_6, %c0_7] : memref<128x128xbf16, #tpu.memory_space<vmem>>, vector<128x128xbf16>
    %c0_8 = arith.constant 0 : index
    %c0_9 = arith.constant 0 : index
    %10 = vector.load %arg5[%c0_8, %c0_9] : memref<1x128xf32, #tpu.memory_space<vmem>>, vector<1x128xf32>
    %cst_10 = arith.constant dense<0.000000e+00> : vector<128x128xf32>
    %11 = tpu.matmul %8, %9, %cst_10 {dimension_numbers = #tpu.dot_dimension_numbers<[1], [0], [0], [1], [0, 0, 1, 1], [], []>} : vector<128x128xbf16>, vector<128x128xbf16>, vector<128x128xf32> -> vector<128x128xf32>
    %12 = vector.broadcast %10 : vector<1x128xf32> to vector<128x128xf32>
    %13 = arith.addf %11, %12 : vector<128x128xf32>
    %cst_11 = arith.constant 0.000000e+00 : f32
    %14 = vector.broadcast %cst_11 : f32 to vector<128x128xf32>
    %15 = arith.maximumf %13, %14 : vector<128x128xf32>
    %16 = arith.truncf %15 : vector<128x128xf32> to vector<128x128xbf16>
    %c0_12 = arith.constant 0 : index
    %c0_13 = arith.constant 0 : index
    %17 = vector.load %arg6[%c0_12, %c0_13] : memref<128x128xbf16, #tpu.memory_space<vmem>>, vector<128x128xbf16>
    %c0_14 = arith.constant 0 : index
    %c0_15 = arith.constant 0 : index
    %18 = vector.load %arg7[%c0_14, %c0_15] : memref<1x128xf32, #tpu.memory_space<vmem>>, vector<1x128xf32>
    %cst_16 = arith.constant dense<0.000000e+00> : vector<128x128xf32>
    %19 = tpu.matmul %16, %17, %cst_16 {dimension_numbers = #tpu.dot_dimension_numbers<[1], [0], [0], [1], [0, 0, 1, 1], [], []>} : vector<128x128xbf16>, vector<128x128xbf16>, vector<128x128xf32> -> vector<128x128xf32>
    %20 = vector.broadcast %18 : vector<1x128xf32> to vector<128x128xf32>
    %21 = arith.addf %19, %20 : vector<128x128xf32>
    %cst_17 = arith.constant 0.000000e+00 : f32
    %22 = vector.broadcast %cst_17 : f32 to vector<128x128xf32>
    %23 = arith.maximumf %21, %22 : vector<128x128xf32>
    %c0_18 = arith.constant 0 : index
    %c0_19 = arith.constant 0 : index
    %24 = vector.load %arg8[%c0_18, %c0_19] : memref<128x128xf32, #tpu.memory_space<vmem>>, vector<128x128xf32>
    tpu.vector_store %arg8[%c0_18, %c0_19], %23 {strides = array<i32>} : memref<128x128xf32, #tpu.memory_space<vmem>>, vector<128x128xf32>,
    return
  }
  func.func @transform_0(%arg0: i32) -> (i32, i32) {
    %c0_i32 = arith.constant 0 : i32
    %c0_i32_0 = arith.constant 0 : i32
    return %arg0, %c0_i32 : i32, i32
  }
  func.func @transform_1(%arg0: i32) -> (i32, i32) {
    %c0_i32 = arith.constant 0 : i32
    %c0_i32_0 = arith.constant 0 : i32
    %c0_i32_1 = arith.constant 0 : i32
    return %c0_i32, %c0_i32_0 : i32, i32
  }
  func.func @transform_2(%arg0: i32) -> (i32, i32) {
    %c0_i32 = arith.constant 0 : i32
    %c0_i32_0 = arith.constant 0 : i32
    %c0_i32_1 = arith.constant 0 : i32
    return %c0_i32, %c0_i32_0 : i32, i32
  }
  func.func @transform_3(%arg0: i32) -> (i32, i32) {
    %c0_i32 = arith.constant 0 : i32
    %c0_i32_0 = arith.constant 0 : i32
    %c0_i32_1 = arith.constant 0 : i32
    return %c0_i32, %c0_i32_0 : i32, i32
  }
  func.func @transform_4(%arg0: i32) -> (i32, i32) {
    %c0_i32 = arith.constant 0 : i32
    %c0_i32_0 = arith.constant 0 : i32
    %c0_i32_1 = arith.constant 0 : i32
    return %c0_i32, %c0_i32_0 : i32, i32
  }
  func.func @transform_5(%arg0: i32) -> (i32, i32) {
    %c0_i32 = arith.constant 0 : i32
    %c0_i32_0 = arith.constant 0 : i32
    %c0_i32_1 = arith.constant 0 : i32
    return %c0_i32, %c0_i32_0 : i32, i32
  }
  func.func @transform_6(%arg0: i32) -> (i32, i32) {
    %c0_i32 = arith.constant 0 : i32
    %c0_i32_0 = arith.constant 0 : i32
    %c0_i32_1 = arith.constant 0 : i32
    return %c0_i32, %c0_i32_0 : i32, i32
  }
  func.func @transform_7(%arg0: i32) -> (i32, i32) {
    %c0_i32 = arith.constant 0 : i32
    %c0_i32_0 = arith.constant 0 : i32
    return %arg0, %c0_i32 : i32, i32
  }
}

</mosaic_0001>

<llo_original>
// kernel: tpu_custom_call.1
$region0: #{tpu_custom_call.1}
  #allocation0 [shape = 'u32[]', space=smem, size = 0x4, offset = 0x4, fixed_abs, tag = 'smem constant byte address 0x4 - core index']
  #allocation1 [shape = 'u32[72,128]{1,0:T(1,128)}', space=vmem, size = 0x9000, scoped, tag = 'internal scratch']
  %s0 = inlined_call_operand.hbm [shape: bf16[256,128], index: 0, kind: input, shape index: {}]
  %s1 = inlined_call_operand.hbm [shape: bf16[128,128], index: 1, kind: input, shape index: {}]
  %s2 = inlined_call_operand.vmem [shape: f32[1,128], index: 2, kind: input, shape index: {}]
  %s3 = inlined_call_operand.hbm [shape: bf16[128,128], index: 3, kind: input, shape index: {}]
  %s4 = inlined_call_operand.vmem [shape: f32[1,128], index: 4, kind: input, shape index: {}]
  %s5 = inlined_call_operand.hbm [shape: bf16[128,128], index: 5, kind: input, shape index: {}]
  %s6 = inlined_call_operand.vmem [shape: f32[1,128], index: 6, kind: input, shape index: {}]
  %s7 = inlined_call_operand.hbm [shape: f32[256,128], index: 7, kind: output, shape index: {}]
  %s8 = sld [smem:[#allocation0]]
  $region77: #{tpu_custom_call.1} parent=0
    _
  %s10 = ssub.s32 1, %s8
  %s11 = scalar_select 0, %s10, %s8
  $region1: #{tpu_custom_call.1} parent=0
    #allocation2 [shape = 'u8[65536]{0}', space=vmem, size = 0x10000, scoped, tag = 'input window, operand 0']
    #allocation3 [shape = 's32[2]{0}', space=sflag, size = 0x8, scoped, tag = 'scoped memory for tpu_custom_call.1']
    #allocation4 [shape = 's32[2]{0}', space=sflag, size = 0x8, scoped, tag = 'scoped memory for tpu_custom_call.1']
    #allocation5 [shape = 'u8[32768]{0}', space=vmem, size = 0x8000, scoped, tag = 'input window, operand 1, single buffered']
    #allocation6 [shape = 's32[1]{0}', space=sflag, size = 0x4, scoped, tag = 'scoped memory for tpu_custom_call.1']
    #allocation7 [shape = 'u8[32768]{0}', space=vmem, size = 0x8000, scoped, tag = 'input window, operand 3, single buffered']
    #allocation8 [shape = 'u8[32768]{0}', space=vmem, size = 0x8000, scoped, tag = 'input window, operand 5, single buffered']
    #allocation9 [shape = 's32[1]{0}', space=sflag, size = 0x4, scoped, tag = 'scoped memory for tpu_custom_call.1']
    #allocation10 [shape = 'u8[131072]{0}', space=vmem, size = 0x20000, scoped, tag = 'output window, operand 0']
    %12 = vsyncpa [#allocation3], 0
    %s13 = scalar_lea.sflag [#allocation3], 1
    %14 = vsyncpa %s13, 0
    %15 = vsyncpa [#allocation6], 0
    %16 = vsyncpa [#allocation9], 0
    %17 = vsyncpa [#allocation4], 0
    %s18 = scalar_lea.sflag [#allocation4], 1
    %19 = vsyncpa %s18, 0
    loop: start=0, step=1, limit=4
    $region2: #{tpu_custom_call.1} parent=1 // loop_pre_header
      _
    $region3: #{tpu_custom_call.1} parent=1 // loop_header
      %s21 = sphi 0, %s25
      %p22 = scmp.ge.s32.totalorder %s21, 4
      %s31 = sphi 0, %s33
      %s34 = sphi 0, %s31
      %s35 = sphi 0, %s34
      %s51 = sphi 0, %s35
      %s55 = sphi 0, %s55
      %s57 = sphi 0, %s55
      %s58 = sphi 0, %s57
      %s72 = sphi 0, %s58
      %s76 = sphi 0, %s76
      %s78 = sphi 0, %s76
      %s79 = sphi 0, %s78
      %s93 = sphi 0, %s79
      %s97 = sphi 0, %s97
      %s99 = sphi 0, %s97
      %s100 = sphi 0, %s99
      %s114 = sphi 0, %s100
      %s118 = sphi 0, %s118
      %s120 = sphi 0, %s118
      %s121 = sphi 0, %s120
      %s135 = sphi 0, %s121
      %s139 = sphi 0, %s139
      %s141 = sphi 0, %s139
      %s142 = sphi 0, %s141
      %s156 = sphi 0, %s142
      %s160 = sphi 0, %s160
      %s162 = sphi 0, %s160
      %s163 = sphi 0, %s162
      %s177 = sphi 0, %s163
      %s183 = sphi 0, %s185
      %s186 = sphi 0, %s183
      %s187 = sphi 0, %s186
      %s203 = sphi 0, %s187
    $region4: #{tpu_custom_call.1} parent=1 // loop_header_branch
      %24 = sbr.rel (%p22) target = $region8
    $region5: #{tpu_custom_call.1} parent=1 // loop_body
      %s26 = ssub.s32 %s21, 1
      %s27 = ssub.s32 %s21, 2
      %s28 = sadd.s32 %s21, 1
      %s29 = ssub.s32 %s21, %s28
      %p30 = scmp.eq.s32.totalorder %s29, 0
      %s32 = sadd.s32 %s31, 1
      %s33 = scalar_select %p30, %s31, %s32
      %p36 = pneg %p30
      %p37 = scmp.eq.s32.totalorder %s21, 1
      %p38 = por %p36, %p37
      %p39 = scmp.ne.s32.totalorder %s31, %s34
      %p40 = scmp.eq.s32.totalorder %s21, 0
      %p41 = por %p39, %p40
      %p42 = scmp.ne.s32.totalorder %s31, %s34
      %p43 = scmp.eq.s32.totalorder %s26, 1
      %p44 = por %p42, %p43
      %p45 = scmp.ne.s32.totalorder %s34, %s35
      %p46 = scmp.eq.s32.totalorder %s26, 0
      %p47 = por %p45, %p46
      %p48 = scmp.ne.s32.totalorder %s34, %s35
      %p49 = scmp.eq.s32.totalorder %s27, 1
      %p50 = por %p48, %p49
      %p52 = scmp.ne.s32.totalorder %s35, %s51
      %p53 = scmp.eq.s32.totalorder %s27, 0
      %p54 = por %p52, %p53
      %s56 = sadd.s32 %s55, 1
      %p59 = scmp.eq.s32.totalorder %s21, 1
      %p60 = scmp.ne.s32.totalorder %s55, %s57
      %p61 = scmp.eq.s32.totalorder %s21, 0
      %p62 = por %p60, %p61
      %p63 = scmp.ne.s32.totalorder %s55, %s57
      %p64 = scmp.eq.s32.totalorder %s26, 1
      %p65 = por %p63, %p64
      %p66 = scmp.ne.s32.totalorder %s57, %s58
      %p67 = scmp.eq.s32.totalorder %s26, 0
      %p68 = por %p66, %p67
      %p69 = scmp.ne.s32.totalorder %s57, %s58
      %p70 = scmp.eq.s32.totalorder %s27, 1
      %p71 = por %p69, %p70
      %p73 = scmp.ne.s32.totalorder %s58, %s72
      %p74 = scmp.eq.s32.totalorder %s27, 0
      %p75 = por %p73, %p74
      %s77 = sadd.s32 %s76, 1
      %p80 = scmp.eq.s32.totalorder %s21, 1
      %p81 = scmp.ne.s32.totalorder %s76, %s78
      %p82 = scmp.eq.s32.totalorder %s21, 0
      %p83 = por %p81, %p82
      %p84 = scmp.ne.s32.totalorder %s76, %s78
      %p85 = scmp.eq.s32.totalorder %s26, 1
      %p86 = por %p84, %p85
      %p87 = scmp.ne.s32.totalorder %s78, %s79
      %p88 = scmp.eq.s32.totalorder %s26, 0
      %p89 = por %p87, %p88
      %p90 = scmp.ne.s32.totalorder %s78, %s79
      %p91 = scmp.eq.s32.totalorder %s27, 1
      %p92 = por %p90, %p91
      %p94 = scmp.ne.s32.totalorder %s79, %s93
      %p95 = scmp.eq.s32.totalorder %s27, 0
      %p96 = por %p94, %p95
      %s98 = sadd.s32 %s97, 1
      %p101 = scmp.eq.s32.totalorder %s21, 1
      %p102 = scmp.ne.s32.totalorder %s97, %s99
      %p103 = scmp.eq.s32.totalorder %s21, 0
      %p104 = por %p102, %p103
      %p105 = scmp.ne.s32.totalorder %s97, %s99
      %p106 = scmp.eq.s32.totalorder %s26, 1
      %p107 = por %p105, %p106
      %p108 = scmp.ne.s32.totalorder %s99, %s100
      %p109 = scmp.eq.s32.totalorder %s26, 0
      %p110 = por %p108, %p109
      %p111 = scmp.ne.s32.totalorder %s99, %s100
      %p112 = scmp.eq.s32.totalorder %s27, 1
      %p113 = por %p111, %p112
      %p115 = scmp.ne.s32.totalorder %s100, %s114
      %p116 = scmp.eq.s32.totalorder %s27, 0
      %p117 = por %p115, %p116
      %s119 = sadd.s32 %s118, 1
      %p122 = scmp.eq.s32.totalorder %s21, 1
      %p123 = scmp.ne.s32.totalorder %s118, %s120
      %p124 = scmp.eq.s32.totalorder %s21, 0
      %p125 = por %p123, %p124
      %p126 = scmp.ne.s32.totalorder %s118, %s120
      %p127 = scmp.eq.s32.totalorder %s26, 1
      %p128 = por %p126, %p127
      %p129 = scmp.ne.s32.totalorder %s120, %s121
      %p130 = scmp.eq.s32.totalorder %s26, 0
      %p131 = por %p129, %p130
      %p132 = scmp.ne.s32.totalorder %s120, %s121
      %p133 = scmp.eq.s32.totalorder %s27, 1
      %p134 = por %p132, %p133
      %p136 = scmp.ne.s32.totalorder %s121, %s135
      %p137 = scmp.eq.s32.totalorder %s27, 0
      %p138 = por %p136, %p137
      %s140 = sadd.s32 %s139, 1
      %p143 = scmp.eq.s32.totalorder %s21, 1
      %p144 = scmp.ne.s32.totalorder %s139, %s141
      %p145 = scmp.eq.s32.totalorder %s21, 0
      %p146 = por %p144, %p145
      %p147 = scmp.ne.s32.totalorder %s139, %s141
      %p148 = scmp.eq.s32.totalorder %s26, 1
      %p149 = por %p147, %p148
      %p150 = scmp.ne.s32.totalorder %s141, %s142
      %p151 = scmp.eq.s32.totalorder %s26, 0
      %p152 = por %p150, %p151
      %p153 = scmp.ne.s32.totalorder %s141, %s142
      %p154 = scmp.eq.s32.totalorder %s27, 1
      %p155 = por %p153, %p154
      %p157 = scmp.ne.s32.totalorder %s142, %s156
      %p158 = scmp.eq.s32.totalorder %s27, 0
      %p159 = por %p157, %p158
      %s161 = sadd.s32 %s160, 1
      %p164 = scmp.eq.s32.totalorder %s21, 1
      %p165 = scmp.ne.s32.totalorder %s160, %s162
      %p166 = scmp.eq.s32.totalorder %s21, 0
      %p167 = por %p165, %p166
      %p168 = scmp.ne.s32.totalorder %s160, %s162
      %p169 = scmp.eq.s32.totalorder %s26, 1
      %p170 = por %p168, %p169
      %p171 = scmp.ne.s32.totalorder %s162, %s163
      %p172 = scmp.eq.s32.totalorder %s26, 0
      %p173 = por %p171, %p172
      %p174 = scmp.ne.s32.totalorder %s162, %s163
      %p175 = scmp.eq.s32.totalorder %s27, 1
      %p176 = por %p174, %p175
      %p178 = scmp.ne.s32.totalorder %s163, %s177
      %p179 = scmp.eq.s32.totalorder %s27, 0
      %p180 = por %p178, %p179
      %s181 = ssub.s32 %s21, %s28
      %p182 = scmp.eq.s32.totalorder %s181, 0
      %s184 = sadd.s32 %s183, 1
      %s185 = scalar_select %p182, %s183, %s184
      %p188 = pneg %p182
      %p189 = scmp.eq.s32.totalorder %s21, 1
      %p190 = por %p188, %p189
      %p191 = scmp.ne.s32.totalorder %s183, %s186
      %p192 = scmp.eq.s32.totalorder %s21, 0
      %p193 = por %p191, %p192
      %p194 = scmp.ne.s32.totalorder %s183, %s186
      %p195 = scmp.eq.s32.totalorder %s26, 1
      %p196 = por %p194, %p195
      %p197 = scmp.ne.s32.totalorder %s186, %s187
      %p198 = scmp.eq.s32.totalorder %s26, 0
      %p199 = por %p197, %p198
      %p200 = scmp.ne.s32.totalorder %s186, %s187
      %p201 = scmp.eq.s32.totalorder %s27, 1
      %p202 = por %p200, %p201
      %p204 = scmp.ne.s32.totalorder %s187, %s203
      %p205 = scmp.eq.s32.totalorder %s27, 0
      %p206 = por %p204, %p205
      %p207 = scmp.le.s32.totalorder 1, %s21
      %p208 = scmp.lt.s32.totalorder %s21, 3
      %p209 = pnand %p207, %p208
      %p210 = pneg %p209
      // Predicated region
      $region9: #{tpu_custom_call.1} parent=5 // pred_check
        _
      $region10: #{tpu_custom_call.1} parent=5 // pred_check_branch
        %212 = sbr.rel (%p209) target = $region12
      $region11: #{tpu_custom_call.1} parent=5 // pred_region
        %s213 = ssub.s32 %s21, 1
        // Predicated region
        $region13: #{tpu_custom_call.1} parent=11 // pred_check
          %p214 = pneg %p68
        $region14: #{tpu_custom_call.1} parent=11 // pred_check_branch
          %216 = sbr.rel (%p214) target = $region16
        $region15: #{tpu_custom_call.1} parent=11 // pred_region
          %218 = vsyncadd [#allocation6], 0
          %s219 = sshll.u32 %s1, 4
          %s220 = int_to_ptr.hbm [resolvable:$true] %s219
          %s221 = sshll.u32 [#allocation5], 4
          %s222 = int_to_ptr.vmem [resolvable:$true] %s221
          %227 = dma.hbm_to_vmem [thread:$0]  %s220, 1024, %s222, [#allocation6], 64, 64, 4
        $region16: #{tpu_custom_call.1} parent=11 // pred_fallthru
          _
        // Predicated region
        $region17: #{tpu_custom_call.1} parent=11 // pred_check
          %p228 = pneg %p89
        $region18: #{tpu_custom_call.1} parent=11 // pred_check_branch
          %230 = sbr.rel (%p228) target = $region20
        $region19: #{tpu_custom_call.1} parent=11 // pred_region
          _
        $region20: #{tpu_custom_call.1} parent=11 // pred_fallthru
          _
        // Predicated region
        $region21: #{tpu_custom_call.1} parent=11 // pred_check
          %p231 = pneg %p110
        $region22: #{tpu_custom_call.1} parent=11 // pred_check_branch
          %233 = sbr.rel (%p231) target = $region24
        $region23: #{tpu_custom_call.1} parent=11 // pred_region
          %235 = vsyncadd [#allocation6], 0
          %s236 = sshll.u32 %s3, 4
          %s237 = int_to_ptr.hbm [resolvable:$true] %s236
          %s238 = sshll.u32 [#allocation7], 4
          %s239 = int_to_ptr.vmem [resolvable:$true] %s238
          %244 = dma.hbm_to_vmem [thread:$0]  %s237, 1024, %s239, [#allocation6], 64, 64, 4
        $region24: #{tpu_custom_call.1} parent=11 // pred_fallthru
          _
        // Predicated region
        $region25: #{tpu_custom_call.1} parent=11 // pred_check
          %p245 = pneg %p131
        $region26: #{tpu_custom_call.1} parent=11 // pred_check_branch
          %247 = sbr.rel (%p245) target = $region28
        $region27: #{tpu_custom_call.1} parent=11 // pred_region
          _
        $region28: #{tpu_custom_call.1} parent=11 // pred_fallthru
          _
        // Predicated region
        $region29: #{tpu_custom_call.1} parent=11 // pred_check
          %p248 = pneg %p152
        $region30: #{tpu_custom_call.1} parent=11 // pred_check_branch
          %250 = sbr.rel (%p248) target = $region32
        $region31: #{tpu_custom_call.1} parent=11 // pred_region
          %252 = vsyncadd [#allocation9], 0
          %s253 = sshll.u32 %s5, 4
          %s254 = int_to_ptr.hbm [resolvable:$true] %s253
          %s255 = sshll.u32 [#allocation8], 4
          %s256 = int_to_ptr.vmem [resolvable:$true] %s255
          %261 = dma.hbm_to_vmem [thread:$0]  %s254, 1024, %s256, [#allocation9], 64, 64, 4
        $region32: #{tpu_custom_call.1} parent=11 // pred_fallthru
          _
        // Predicated region
        $region33: #{tpu_custom_call.1} parent=11 // pred_check
          %p262 = pneg %p173
        $region34: #{tpu_custom_call.1} parent=11 // pred_check_branch
          %264 = sbr.rel (%p262) target = $region36
        $region35: #{tpu_custom_call.1} parent=11 // pred_region
          _
        $region36: #{tpu_custom_call.1} parent=11 // pred_fallthru
          _
      $region12: #{tpu_custom_call.1} parent=5 // pred_fallthru
        _
      %p265 = scmp.lt.s32.totalorder %s21, 2
      // Predicated region
      $region37: #{tpu_custom_call.1} parent=5 // pred_check
        %p266 = pneg %p265
      $region38: #{tpu_custom_call.1} parent=5 // pred_check_branch
        %268 = sbr.rel (%p266) target = $region40
      $region39: #{tpu_custom_call.1} parent=5 // pred_region
        // Predicated region
        $region41: #{tpu_custom_call.1} parent=39 // pred_check
          %p269 = pneg %p41
        $region42: #{tpu_custom_call.1} parent=39 // pred_check_branch
          %271 = sbr.rel (%p269) target = $region44
        $region43: #{tpu_custom_call.1} parent=39 // pred_region
          %s272 = sand.u32 %s31, 1
          %s273 = scalar_lea.sflag [#allocation3], %s272
          %s274 = sand.u32 %s31, 1
          %s275 = smul.addr %s274, 64
          %s276 = scalar_lea.vmem [#allocation2], %s275
          %s277 = smul.u32 16, %s21
          %279 = vsyncadd %s273, 0
          %s280 = smul.addr %s277, 4
          %s281 = scalar_lea.hbm %s0, %s280
          %s282 = sshll.u32 %s281, 4
          %s283 = int_to_ptr.hbm [resolvable:$true] %s282
          %s284 = sshll.u32 %s276, 4
          %s285 = int_to_ptr.vmem [resolvable:$true] %s284
          %290 = dma.hbm_to_vmem [thread:$0]  %s283, 1024, %s285, %s273, 64, 64, 4
        $region44: #{tpu_custom_call.1} parent=39 // pred_fallthru
          _
      $region40: #{tpu_custom_call.1} parent=5 // pred_fallthru
        _
      %p291 = scmp.le.s32.totalorder 1, %s21
      %p292 = scmp.lt.s32.totalorder %s21, 3
      %p293 = pnand %p291, %p292
      %p294 = pneg %p293
      // Predicated region
      $region45: #{tpu_custom_call.1} parent=5 // pred_check
        _
      $region46: #{tpu_custom_call.1} parent=5 // pred_check_branch
        %296 = sbr.rel (%p293) target = $region48
      $region47: #{tpu_custom_call.1} parent=5 // pred_region
        %s297 = ssub.s32 %s21, 1
        %s298 = sand.u32 %s34, 1
        %s299 = scalar_lea.sflag [#allocation3], %s298
        %s300 = sand.u32 %s34, 1
        %s301 = smul.addr %s300, 64
        %s302 = scalar_lea.vmem [#allocation2], %s301
        // Predicated region
        $region49: #{tpu_custom_call.1} parent=47 // pred_check
          %p303 = pneg %p47
        $region50: #{tpu_custom_call.1} parent=47 // pred_check_branch
          %305 = sbr.rel (%p303) target = $region52
        $region51: #{tpu_custom_call.1} parent=47 // pred_region
          %307 = dma.done %s299, 1024
        $region52: #{tpu_custom_call.1} parent=47 // pred_fallthru
          _
        // Predicated region
        $region53: #{tpu_custom_call.1} parent=47 // pred_check
          %p308 = pneg %p68
        $region54: #{tpu_custom_call.1} parent=47 // pred_check_branch
          %310 = sbr.rel (%p308) target = $region56
        $region55: #{tpu_custom_call.1} parent=47 // pred_region
          %312 = dma.done [#allocation6], 1024
        $region56: #{tpu_custom_call.1} parent=47 // pred_fallthru
          _
        // Predicated region
        $region57: #{tpu_custom_call.1} parent=47 // pred_check
          %p313 = pneg %p110
        $region58: #{tpu_custom_call.1} parent=47 // pred_check_branch
          %315 = sbr.rel (%p313) target = $region60
        $region59: #{tpu_custom_call.1} parent=47 // pred_region
          %317 = dma.done [#allocation6], 1024
        $region60: #{tpu_custom_call.1} parent=47 // pred_fallthru
          _
        // Predicated region
        $region61: #{tpu_custom_call.1} parent=47 // pred_check
          %p318 = pneg %p152
        $region62: #{tpu_custom_call.1} parent=47 // pred_check_branch
          %320 = sbr.rel (%p318) target = $region64
        $region63: #{tpu_custom_call.1} parent=47 // pred_region
          %322 = dma.done [#allocation9], 1024
        $region64: #{tpu_custom_call.1} parent=47 // pred_fallthru
          _
        %s323 = sand.u32 %s34, 1
        %s324 = scalar_lea.sflag [#allocation3], %s323
        %s325 = sand.u32 %s34, 1
        %s326 = smul.addr %s325, 64
        %s327 = scalar_lea.vmem [#allocation2], %s326
        %p328 = pneg %p47
        %p329 = pneg %p44
        %p330 = pneg %p68
        %p331 = pneg %p65
        %p332 = pneg %p89
        %p333 = pneg %p86
        %p334 = pneg %p110
        %p335 = pneg %p107
        %p336 = pneg %p131
        %p337 = pneg %p128
        %p338 = pneg %p152
        %p339 = pneg %p149
        %p340 = pneg %p173
        %p341 = pneg %p170
        %p342 = pneg %p199
        %p343 = pneg %p196
        %s344 = sand.u32 %s186, 1
        %s345 = scalar_lea.sflag [#allocation4], %s344
        %s346 = sand.u32 %s186, 1
        %s347 = smul.addr %s346, 128
        %s348 = scalar_lea.vmem [#allocation10], %s347
        %s349 = smul.u32 16, %s26
        %s350 = smul.u32 16, %s26
        %v351 = vld [vmem:[%s302] sm:$0xf]
        %v352 = vld [vmem:[%s302 + $0x4] sm:$0xf]
        %v353 = vld [vmem:[%s302 + $0x8] sm:$0xf]
        %v354 = vld [vmem:[%s302 + $0xc] sm:$0xf]
        %v355 = vld [vmem:[%s302 + $0x10] sm:$0xf]
        %v356 = vld [vmem:[%s302 + $0x14] sm:$0xf]
        %v357 = vld [vmem:[%s302 + $0x18] sm:$0xf]
        %v358 = vld [vmem:[%s302 + $0x1c] sm:$0xf]
        %v359 = vld [vmem:[%s302 + $0x20] sm:$0xf]
        %v360 = vld [vmem:[%s302 + $0x24] sm:$0xf]
        %v361 = vld [vmem:[%s302 + $0x28] sm:$0xf]
        %v362 = vld [vmem:[%s302 + $0x2c] sm:$0xf]
        %v363 = vld [vmem:[%s302 + $0x30] sm:$0xf]
        %v364 = vld [vmem:[%s302 + $0x34] sm:$0xf]
        %v365 = vld [vmem:[%s302 + $0x38] sm:$0xf]
        %v366 = vld [vmem:[%s302 + $0x3c] sm:$0xf]
        %v367 = vld [vmem:[#allocation5] sm:$0xf]
        %v368 = vld [vmem:[#allocation5 + $0x4] sm:$0xf]
        %v369 = vld [vmem:[#allocation5 + $0x8] sm:$0xf]
        %v370 = vld [vmem:[#allocation5 + $0xc] sm:$0xf]
        %v371 = vld [vmem:[#allocation5 + $0x10] sm:$0xf]
        %v372 = vld [vmem:[#allocation5 + $0x14] sm:$0xf]
        %v373 = vld [vmem:[#allocation5 + $0x18] sm:$0xf]
        %v374 = vld [vmem:[#allocation5 + $0x1c] sm:$0xf]
        %v375 = vld [vmem:[#allocation5 + $0x20] sm:$0xf]
        %v376 = vld [vmem:[#allocation5 + $0x24] sm:$0xf]
        %v377 = vld [vmem:[#allocation5 + $0x28] sm:$0xf]
        %v378 = vld [vmem:[#allocation5 + $0x2c] sm:$0xf]
        %v379 = vld [vmem:[#allocation5 + $0x30] sm:$0xf]
        %v380 = vld [vmem:[#allocation5 + $0x34] sm:$0xf]
        %v381 = vld [vmem:[#allocation5 + $0x38] sm:$0xf]
        %v382 = vld [vmem:[#allocation5 + $0x3c] sm:$0xf]
        %v383 = vld [vmem:[%s2] sm:$0x1]
        %v385 = vperm.slane %v383, 0
        %v403 = vunpack.c.l.b16 %v351
        %v404 = vunpack.c.l.b16 %v352
        %v405 = vunpack.c.l.b16 %v353
        %v406 = vunpack.c.l.b16 %v354
        %v407 = vunpack.c.l.b16 %v355
        %v408 = vunpack.c.l.b16 %v356
        %v409 = vunpack.c.l.b16 %v357
        %v410 = vunpack.c.l.b16 %v358
        %v411 = vunpack.c.l.b16 %v359
        %v412 = vunpack.c.l.b16 %v360
        %v413 = vunpack.c.l.b16 %v361
        %v414 = vunpack.c.l.b16 %v362
        %v415 = vunpack.c.l.b16 %v363
        %v416 = vunpack.c.l.b16 %v364
        %v417 = vunpack.c.l.b16 %v365
        %v418 = vunpack.c.l.b16 %v366
        %v419 = vpack.c.b16 %v404, %v403
        %v420 = vpack.c.b16 %v406, %v405
        %v421 = vpack.c.b16 %v408, %v407
        %v422 = vpack.c.b16 %v410, %v409
        %v423 = vpack.c.b16 %v412, %v411
        %v424 = vpack.c.b16 %v414, %v413
        %v425 = vpack.c.b16 %v416, %v415
        %v426 = vpack.c.b16 %v418, %v417
        %v451 = vunpack.c.l.b16 %v367
        %v452 = vunpack.c.l.b16 %v368
        %v453 = vunpack.c.l.b16 %v369
        %v454 = vunpack.c.l.b16 %v370
        %v455 = vunpack.c.l.b16 %v371
        %v456 = vunpack.c.l.b16 %v372
        %v457 = vunpack.c.l.b16 %v373
        %v458 = vunpack.c.l.b16 %v374
        %v459 = vunpack.c.l.b16 %v375
        %v460 = vunpack.c.l.b16 %v376
        %v461 = vunpack.c.l.b16 %v377
        %v462 = vunpack.c.l.b16 %v378
        %v463 = vunpack.c.l.b16 %v379
        %v464 = vunpack.c.l.b16 %v380
        %v465 = vunpack.c.l.b16 %v381
        %v466 = vunpack.c.l.b16 %v382
        %v467 = vpack.c.b16 %v452, %v451
        %v468 = vpack.c.b16 %v454, %v453
        %v469 = vpack.c.b16 %v456, %v455
        %v470 = vpack.c.b16 %v458, %v457
        %v471 = vpack.c.b16 %v460, %v459
        %v472 = vpack.c.b16 %v462, %v461
        %v473 = vpack.c.b16 %v464, %v463
        %v474 = vpack.c.b16 %v466, %v465
        %483 = vmatpush.bf16.msra.mxu0 %v474
        %484 = vmatpush.bf16.msra.mxu0 %v473
        %485 = vmatpush.bf16.msra.mxu0 %v472
        %486 = vmatpush.bf16.msra.mxu0 %v471
        %487 = vmatpush.bf16.msra.mxu0 %v470
        %488 = vmatpush.bf16.msra.mxu0 %v469
        %489 = vmatpush.bf16.msra.mxu0 %v468
        %490 = vmatpush.bf16.msra.mxu0 %v467
        %491 = vmatmul.bf16.gmra.mxu0 %v419
        %v492 = vpop.f32.mrf.mxu0
        %v493 = vadd.f32 %v385, %v492
        %v494 = vpop.f32.mrf.mxu0
        %v495 = vadd.f32 %v385, %v494
        %496 = vmatmul.bf16.gmra.mxu0 %v420
        %v497 = vpop.f32.mrf.mxu0
        %v498 = vadd.f32 %v385, %v497
        %v499 = vpop.f32.mrf.mxu0
        %v500 = vadd.f32 %v385, %v499
        %501 = vmatmul.bf16.gmra.mxu0 %v421
        %v502 = vpop.f32.mrf.mxu0
        %v503 = vadd.f32 %v385, %v502
        %v504 = vpop.f32.mrf.mxu0
        %v505 = vadd.f32 %v385, %v504
        %506 = vmatmul.bf16.gmra.mxu0 %v422
        %v507 = vpop.f32.mrf.mxu0
        %v508 = vadd.f32 %v385, %v507
        %v509 = vpop.f32.mrf.mxu0
        %v510 = vadd.f32 %v385, %v509
        %511 = vmatmul.bf16.gmra.mxu0 %v423
        %v512 = vpop.f32.mrf.mxu0
        %v513 = vadd.f32 %v385, %v512
        %v514 = vpop.f32.mrf.mxu0
        %v515 = vadd.f32 %v385, %v514
        %516 = vmatmul.bf16.gmra.mxu0 %v424
        %v517 = vpop.f32.mrf.mxu0
        %v518 = vadd.f32 %v385, %v517
        %v519 = vpop.f32.mrf.mxu0
        %v520 = vadd.f32 %v385, %v519
        %521 = vmatmul.bf16.gmra.mxu0 %v425
        %v522 = vpop.f32.mrf.mxu0
        %v523 = vadd.f32 %v385, %v522
        %v524 = vpop.f32.mrf.mxu0
        %v525 = vadd.f32 %v385, %v524
        %526 = vmatmul.bf16.gmra.mxu0 %v426
        %v527 = vpop.f32.mrf.mxu0
        %v528 = vadd.f32 %v385, %v527
        %v529 = vpop.f32.mrf.mxu0
        %v530 = vadd.f32 %v385, %v529
        %531 = vdwg.mxu0
        %v532 = vmax.f32 %v493, 0.0
        %v533 = vmax.f32 %v495, 0.0
        %v534 = vmax.f32 %v498, 0.0
        %v535 = vmax.f32 %v500, 0.0
        %v536 = vmax.f32 %v503, 0.0
        %v537 = vmax.f32 %v505, 0.0
        %v538 = vmax.f32 %v508, 0.0
        %v539 = vmax.f32 %v510, 0.0
        %v540 = vmax.f32 %v513, 0.0
        %v541 = vmax.f32 %v515, 0.0
        %v542 = vmax.f32 %v518, 0.0
        %v543 = vmax.f32 %v520, 0.0
        %v544 = vmax.f32 %v523, 0.0
        %v545 = vmax.f32 %v525, 0.0
        %v546 = vmax.f32 %v528, 0.0
        %v547 = vmax.f32 %v530, 0.0
        %v548 = vpack.c.bf16 %v533, %v532
        %v549 = vpack.c.bf16 %v535, %v534
        %v550 = vpack.c.bf16 %v537, %v536
        %v551 = vpack.c.bf16 %v539, %v538
        %v552 = vpack.c.bf16 %v541, %v540
        %v553 = vpack.c.bf16 %v543, %v542
        %v554 = vpack.c.bf16 %v545, %v544
        %v555 = vpack.c.bf16 %v547, %v546
        %v556 = vld [vmem:[#allocation7] sm:$0xf]
        %v557 = vld [vmem:[#allocation7 + $0x4] sm:$0xf]
        %v558 = vld [vmem:[#allocation7 + $0x8] sm:$0xf]
        %v559 = vld [vmem:[#allocation7 + $0xc] sm:$0xf]
        %v560 = vld [vmem:[#allocation7 + $0x10] sm:$0xf]
        %v561 = vld [vmem:[#allocation7 + $0x14] sm:$0xf]
        %v562 = vld [vmem:[#allocation7 + $0x18] sm:$0xf]
        %v563 = vld [vmem:[#allocation7 + $0x1c] sm:$0xf]
        %v564 = vld [vmem:[#allocation7 + $0x20] sm:$0xf]
        %v565 = vld [vmem:[#allocation7 + $0x24] sm:$0xf]
        %v566 = vld [vmem:[#allocation7 + $0x28] sm:$0xf]
        %v567 = vld [vmem:[#allocation7 + $0x2c] sm:$0xf]
        %v568 = vld [vmem:[#allocation7 + $0x30] sm:$0xf]
        %v569 = vld [vmem:[#allocation7 + $0x34] sm:$0xf]
        %v570 = vld [vmem:[#allocation7 + $0x38] sm:$0xf]
        %v571 = vld [vmem:[#allocation7 + $0x3c] sm:$0xf]
        %v572 = vld [vmem:[%s4] sm:$0x1]
        %v574 = vperm.slane %v572, 0
        %v592 = vunpack.c.l.b16 %v556
        %v593 = vunpack.c.l.b16 %v557
        %v594 = vunpack.c.l.b16 %v558
        %v595 = vunpack.c.l.b16 %v559
        %v596 = vunpack.c.l.b16 %v560
        %v597 = vunpack.c.l.b16 %v561
        %v598 = vunpack.c.l.b16 %v562
        %v599 = vunpack.c.l.b16 %v563
        %v600 = vunpack.c.l.b16 %v564
        %v601 = vunpack.c.l.b16 %v565
        %v602 = vunpack.c.l.b16 %v566
        %v603 = vunpack.c.l.b16 %v567
        %v604 = vunpack.c.l.b16 %v568
        %v605 = vunpack.c.l.b16 %v569
        %v606 = vunpack.c.l.b16 %v570
        %v607 = vunpack.c.l.b16 %v571
        %v608 = vpack.c.b16 %v593, %v592
        %v609 = vpack.c.b16 %v595, %v594
        %v610 = vpack.c.b16 %v597, %v596
        %v611 = vpack.c.b16 %v599, %v598
        %v612 = vpack.c.b16 %v601, %v600
        %v613 = vpack.c.b16 %v603, %v602
        %v614 = vpack.c.b16 %v605, %v604
        %v615 = vpack.c.b16 %v607, %v606
        %624 = vmatpush.bf16.msra.mxu0 %v615
        %625 = vmatpush.bf16.msra.mxu0 %v614
        %626 = vmatpush.bf16.msra.mxu0 %v613
        %627 = vmatpush.bf16.msra.mxu0 %v612
        %628 = vmatpush.bf16.msra.mxu0 %v611
        %629 = vmatpush.bf16.msra.mxu0 %v610
        %630 = vmatpush.bf16.msra.mxu0 %v609
        %631 = vmatpush.bf16.msra.mxu0 %v608
        %632 = vmatmul.bf16.gmra.mxu0 %v548
        %v633 = vpop.f32.mrf.mxu0
        %v634 = vadd.f32 %v574, %v633
        %v635 = vpop.f32.mrf.mxu0
        %v636 = vadd.f32 %v574, %v635
        %637 = vmatmul.bf16.gmra.mxu0 %v549
        %v638 = vpop.f32.mrf.mxu0
        %v639 = vadd.f32 %v574, %v638
        %v640 = vpop.f32.mrf.mxu0
        %v641 = vadd.f32 %v574, %v640
        %642 = vmatmul.bf16.gmra.mxu0 %v550
        %v643 = vpop.f32.mrf.mxu0
        %v644 = vadd.f32 %v574, %v643
        %v645 = vpop.f32.mrf.mxu0
        %v646 = vadd.f32 %v574, %v645
        %647 = vmatmul.bf16.gmra.mxu0 %v551
        %v648 = vpop.f32.mrf.mxu0
        %v649 = vadd.f32 %v574, %v648
        %v650 = vpop.f32.mrf.mxu0
        %v651 = vadd.f32 %v574, %v650
        %652 = vmatmul.bf16.gmra.mxu0 %v552
        %v653 = vpop.f32.mrf.mxu0
        %v654 = vadd.f32 %v574, %v653
        %v655 = vpop.f32.mrf.mxu0
        %v656 = vadd.f32 %v574, %v655
        %657 = vmatmul.bf16.gmra.mxu0 %v553
        %v658 = vpop.f32.mrf.mxu0
        %v659 = vadd.f32 %v574, %v658
        %v660 = vpop.f32.mrf.mxu0
        %v661 = vadd.f32 %v574, %v660
        %662 = vmatmul.bf16.gmra.mxu0 %v554
        %v663 = vpop.f32.mrf.mxu0
        %v664 = vadd.f32 %v574, %v663
        %v665 = vpop.f32.mrf.mxu0
        %v666 = vadd.f32 %v574, %v665
        %667 = vmatmul.bf16.gmra.mxu0 %v555
        %v668 = vpop.f32.mrf.mxu0
        %v669 = vadd.f32 %v574, %v668
        %v670 = vpop.f32.mrf.mxu0
        %v671 = vadd.f32 %v574, %v670
        %672 = vdwg.mxu0
        %v673 = vmax.f32 %v634, 0.0
        %v674 = vmax.f32 %v636, 0.0
        %v675 = vmax.f32 %v639, 0.0
        %v676 = vmax.f32 %v641, 0.0
        %v677 = vmax.f32 %v644, 0.0
        %v678 = vmax.f32 %v646, 0.0
        %v679 = vmax.f32 %v649, 0.0
        %v680 = vmax.f32 %v651, 0.0
        %v681 = vmax.f32 %v654, 0.0
        %v682 = vmax.f32 %v656, 0.0
        %v683 = vmax.f32 %v659, 0.0
        %v684 = vmax.f32 %v661, 0.0
        %v685 = vmax.f32 %v664, 0.0
        %v686 = vmax.f32 %v666, 0.0
        %v687 = vmax.f32 %v669, 0.0
        %v688 = vmax.f32 %v671, 0.0
        %v689 = vpack.c.bf16 %v674, %v673
        %v690 = vpack.c.bf16 %v676, %v675
        %v691 = vpack.c.bf16 %v678, %v677
        %v692 = vpack.c.bf16 %v680, %v679
        %v693 = vpack.c.bf16 %v682, %v681
        %v694 = vpack.c.bf16 %v684, %v683
        %v695 = vpack.c.bf16 %v686, %v685
        %v696 = vpack.c.bf16 %v688, %v687
        %v697 = vld [vmem:[#allocation8] sm:$0xf]
        %v698 = vld [vmem:[#allocation8 + $0x4] sm:$0xf]
        %v699 = vld [vmem:[#allocation8 + $0x8] sm:$0xf]
        %v700 = vld [vmem:[#allocation8 + $0xc] sm:$0xf]
        %v701 = vld [vmem:[#allocation8 + $0x10] sm:$0xf]
        %v702 = vld [vmem:[#allocation8 + $0x14] sm:$0xf]
        %v703 = vld [vmem:[#allocation8 + $0x18] sm:$0xf]
        %v704 = vld [vmem:[#allocation8 + $0x1c] sm:$0xf]
        %v705 = vld [vmem:[#allocation8 + $0x20] sm:$0xf]
        %v706 = vld [vmem:[#allocation8 + $0x24] sm:$0xf]
        %v707 = vld [vmem:[#allocation8 + $0x28] sm:$0xf]
        %v708 = vld [vmem:[#allocation8 + $0x2c] sm:$0xf]
        %v709 = vld [vmem:[#allocation8 + $0x30] sm:$0xf]
        %v710 = vld [vmem:[#allocation8 + $0x34] sm:$0xf]
        %v711 = vld [vmem:[#allocation8 + $0x38] sm:$0xf]
        %v712 = vld [vmem:[#allocation8 + $0x3c] sm:$0xf]
        %v713 = vld [vmem:[%s6] sm:$0x1]
        %v715 = vperm.slane %v713, 0
        %v733 = vunpack.c.l.b16 %v697
        %v734 = vunpack.c.l.b16 %v698
        %v735 = vunpack.c.l.b16 %v699
        %v736 = vunpack.c.l.b16 %v700
        %v737 = vunpack.c.l.b16 %v701
        %v738 = vunpack.c.l.b16 %v702
        %v739 = vunpack.c.l.b16 %v703
        %v740 = vunpack.c.l.b16 %v704
        %v741 = vunpack.c.l.b16 %v705
        %v742 = vunpack.c.l.b16 %v706
        %v743 = vunpack.c.l.b16 %v707
        %v744 = vunpack.c.l.b16 %v708
        %v745 = vunpack.c.l.b16 %v709
        %v746 = vunpack.c.l.b16 %v710
        %v747 = vunpack.c.l.b16 %v711
        %v748 = vunpack.c.l.b16 %v712
        %v749 = vpack.c.b16 %v734, %v733
        %v750 = vpack.c.b16 %v736, %v735
        %v751 = vpack.c.b16 %v738, %v737
        %v752 = vpack.c.b16 %v740, %v739
        %v753 = vpack.c.b16 %v742, %v741
        %v754 = vpack.c.b16 %v744, %v743
        %v755 = vpack.c.b16 %v746, %v745
        %v756 = vpack.c.b16 %v748, %v747
        %765 = vmatpush.bf16.msra.mxu0 %v756
        %766 = vmatpush.bf16.msra.mxu0 %v755
        %767 = vmatpush.bf16.msra.mxu0 %v754
        %768 = vmatpush.bf16.msra.mxu0 %v753
        %769 = vmatpush.bf16.msra.mxu0 %v752
        %770 = vmatpush.bf16.msra.mxu0 %v751
        %771 = vmatpush.bf16.msra.mxu0 %v750
        %772 = vmatpush.bf16.msra.mxu0 %v749
        %773 = vmatmul.bf16.gmra.mxu0 %v689
        %v774 = vpop.f32.mrf.mxu0
        %v775 = vadd.f32 %v715, %v774
        %v776 = vpop.f32.mrf.mxu0
        %v777 = vadd.f32 %v715, %v776
        %778 = vmatmul.bf16.gmra.mxu0 %v690
        %v779 = vpop.f32.mrf.mxu0
        %v780 = vadd.f32 %v715, %v779
        %v781 = vpop.f32.mrf.mxu0
        %v782 = vadd.f32 %v715, %v781
        %783 = vmatmul.bf16.gmra.mxu0 %v691
        %v784 = vpop.f32.mrf.mxu0
        %v785 = vadd.f32 %v715, %v784
        %v786 = vpop.f32.mrf.mxu0
        %v787 = vadd.f32 %v715, %v786
        %788 = vmatmul.bf16.gmra.mxu0 %v692
        %v789 = vpop.f32.mrf.mxu0
        %v790 = vadd.f32 %v715, %v789
        %v791 = vpop.f32.mrf.mxu0
        %v792 = vadd.f32 %v715, %v791
        %793 = vmatmul.bf16.gmra.mxu0 %v693
        %v794 = vpop.f32.mrf.mxu0
        %v795 = vadd.f32 %v715, %v794
        %v796 = vpop.f32.mrf.mxu0
        %v797 = vadd.f32 %v715, %v796
        %798 = vmatmul.bf16.gmra.mxu0 %v694
        %v799 = vpop.f32.mrf.mxu0
        %v800 = vadd.f32 %v715, %v799
        %v801 = vpop.f32.mrf.mxu0
        %v802 = vadd.f32 %v715, %v801
        %803 = vmatmul.bf16.gmra.mxu0 %v695
        %v804 = vpop.f32.mrf.mxu0
        %v805 = vadd.f32 %v715, %v804
        %v806 = vpop.f32.mrf.mxu0
        %v807 = vadd.f32 %v715, %v806
        %808 = vmatmul.bf16.gmra.mxu0 %v696
        %v809 = vpop.f32.mrf.mxu0
        %v810 = vadd.f32 %v715, %v809
        %v811 = vpop.f32.mrf.mxu0
        %v812 = vadd.f32 %v715, %v811
        %813 = vdwg.mxu0
        %v814 = vmax.f32 %v775, 0.0
        %v815 = vmax.f32 %v777, 0.0
        %v816 = vmax.f32 %v780, 0.0
        %v817 = vmax.f32 %v782, 0.0
        %v818 = vmax.f32 %v785, 0.0
        %v819 = vmax.f32 %v787, 0.0
        %v820 = vmax.f32 %v790, 0.0
        %v821 = vmax.f32 %v792, 0.0
        %v822 = vmax.f32 %v795, 0.0
        %v823 = vmax.f32 %v797, 0.0
        %v824 = vmax.f32 %v800, 0.0
        %v825 = vmax.f32 %v802, 0.0
        %v826 = vmax.f32 %v805, 0.0
        %v827 = vmax.f32 %v807, 0.0
        %v828 = vmax.f32 %v810, 0.0
        %v829 = vmax.f32 %v812, 0.0
        %830 = vst [vmem:[%s348] sm:$0xff] %v814
        %831 = vst [vmem:[%s348 + $0x8] sm:$0xff] %v815
        %832 = vst [vmem:[%s348 + $0x10] sm:$0xff] %v816
        %833 = vst [vmem:[%s348 + $0x18] sm:$0xff] %v817
        %834 = vst [vmem:[%s348 + $0x20] sm:$0xff] %v818
        %835 = vst [vmem:[%s348 + $0x28] sm:$0xff] %v819
        %836 = vst [vmem:[%s348 + $0x30] sm:$0xff] %v820
        %837 = vst [vmem:[%s348 + $0x38] sm:$0xff] %v821
        %838 = vst [vmem:[%s348 + $0x40] sm:$0xff] %v822
        %839 = vst [vmem:[%s348 + $0x48] sm:$0xff] %v823
        %840 = vst [vmem:[%s348 + $0x50] sm:$0xff] %v824
        %841 = vst [vmem:[%s348 + $0x58] sm:$0xff] %v825
        %842 = vst [vmem:[%s348 + $0x60] sm:$0xff] %v826
        %843 = vst [vmem:[%s348 + $0x68] sm:$0xff] %v827
        %844 = vst [vmem:[%s348 + $0x70] sm:$0xff] %v828
        %845 = vst [vmem:[%s348 + $0x78] sm:$0xff] %v829
        %s846 = sand.u32 %s186, 1
        %s847 = scalar_lea.sflag [#allocation4], %s846
        %s848 = sand.u32 %s186, 1
        %s849 = smul.addr %s848, 128
        %s850 = scalar_lea.vmem [#allocation10], %s849
        // Predicated region
        $region65: #{tpu_custom_call.1} parent=47 // pred_check
          %p851 = pneg %p196
        $region66: #{tpu_custom_call.1} parent=47 // pred_check_branch
          %853 = sbr.rel (%p851) target = $region68
        $region67: #{tpu_custom_call.1} parent=47 // pred_region
          %s854 = smul.u32 16, %s26
          %856 = vsyncadd %s847, 0
          %s857 = smul.addr %s854, 8
          %s858 = scalar_lea.hbm %s7, %s857
          %s859 = sshll.u32 %s850, 4
          %s860 = int_to_ptr.vmem [resolvable:$true] %s859
          %s861 = sshll.u32 %s858, 4
          %s862 = int_to_ptr.hbm [resolvable:$true] %s861
          %867 = dma.vmem_to_hbm [thread:$0]  %s860, 2048, %s862, %s847, 128, 128, 8
        $region68: #{tpu_custom_call.1} parent=47 // pred_fallthru
          _
      $region48: #{tpu_custom_call.1} parent=5 // pred_fallthru
        _
      %p868 = scmp.le.s32.totalorder 2, %s21
      // Predicated region
      $region69: #{tpu_custom_call.1} parent=5 // pred_check
        %p869 = pneg %p868
      $region70: #{tpu_custom_call.1} parent=5 // pred_check_branch
        %871 = sbr.rel (%p869) target = $region72
      $region71: #{tpu_custom_call.1} parent=5 // pred_region
        %s872 = ssub.s32 %s21, 2
        // Predicated region
        $region73: #{tpu_custom_call.1} parent=71 // pred_check
          %p873 = pneg %p202
        $region74: #{tpu_custom_call.1} parent=71 // pred_check_branch
          %875 = sbr.rel (%p873) target = $region76
        $region75: #{tpu_custom_call.1} parent=71 // pred_region
          %s876 = sand.u32 %s187, 1
          %s877 = scalar_lea.sflag [#allocation4], %s876
          %s878 = sand.u32 %s187, 1
          %s879 = smul.addr %s878, 128
          %s880 = scalar_lea.vmem [#allocation10], %s879
          %882 = dma.done %s877, 2048
        $region76: #{tpu_custom_call.1} parent=71 // pred_fallthru
          _
      $region72: #{tpu_custom_call.1} parent=5 // pred_fallthru
        _
    $region6: #{tpu_custom_call.1} parent=1 // loop_footer
      %s25 = sadd.s32 1, %s21
    $region7: #{tpu_custom_call.1} parent=1 // loop_footer_branch
      %20 = sbr.rel target = $region3
    $region8: #{tpu_custom_call.1} parent=1 // loop_exit
      _
    %883 = vsyncpa [#allocation3], 1
    %s884 = scalar_lea.sflag [#allocation3], 1
    %885 = vsyncpa %s884, 1
    %886 = vsyncpa [#allocation6], 1
    %887 = vsyncpa [#allocation9], 1
    %888 = vsyncpa [#allocation4], 1
    %s889 = scalar_lea.sflag [#allocation4], 1
    %890 = vsyncpa %s889, 1

</llo_original>
